<compile_context>
chip_gen: v5e
topology: v5e:2x2
jax: 0.10.0
libtpu: 0.0.40
codegen_flags: <defaults>
</compile_context>

<pallas_src>
import functools

import jax
import jax.numpy as jnp
from jax.experimental import pallas as pl
from jax.experimental.pallas import tpu as pltpu


_LANES = 128
# "minus infinity" that stays NaN-free through exp() in f32.
# Do NOT change to -inf (inf - inf -> NaN) and keep the stats in f32:
# correctness of the padded-lane handling relies on exp(_NEG_BIG - x) == 0.
_NEG_BIG = -1e30


def _vmem_capacity_bytes():
    try:
        cap = int(getattr(pltpu.get_tpu_info(), "vmem_capacity_bytes", 0))
        if cap > 0:
            return cap
    except Exception:
        pass
    return 64 << 20            # conservative fallback: v7x has the smallest VMEM


def _choose_tile_rows(n_rows, d, itemsize):
    """Largest 128-multiple row tile whose working set fits the VMEM budget."""
    cap = _vmem_capacity_bytes()
    budget = min(max(cap * 3 // 8, 16 << 20), 48 << 20)
    # 3 inputs double-buffered + ~4 live f32 (T, D) intermediates (a, dp, dn, sq).
    per_row = d * (3 * 2 * itemsize + 4 * 4)
    t = budget // max(per_row, 1)
    t = max(_LANES, min(int(t), 8192))
    t = (t // _LANES) * _LANES
    # Keep the block no larger than the (lane-padded) batch.
    t = min(t, max(_LANES, (n_rows // _LANES) * _LANES))
    return t


def _circle_loss3_kernel(a_ref, zp_ref, zn_ref,
                         max_p_ref, max_n_ref, sum_p_ref, sum_n_ref,
                         *, m, gamma, n_valid, tile_rows, needs_mask):
    step = pl.program_id(0)

    @pl.when(step == 0)
    def _init():
        max_p_ref[...] = jnp.full_like(max_p_ref, _NEG_BIG)
        max_n_ref[...] = jnp.full_like(max_n_ref, _NEG_BIG)
        sum_p_ref[...] = jnp.zeros_like(sum_p_ref)
        sum_n_ref[...] = jnp.zeros_like(sum_n_ref)

    a = a_ref[...].astype(jnp.float32)                         # (T, D)
    dp = a - zp_ref[...].astype(jnp.float32)
    dn = a - zn_ref[...].astype(jnp.float32)

    d = a.shape[1]
    r = tile_rows // _LANES
    fold = (r, _LANES, d)                                      # free leading split
    dp2 = jnp.sum((dp * dp).reshape(fold), axis=-1)            # (R, 128) lane-dense
    dn2 = jnp.sum((dn * dn).reshape(fold), axis=-1)

    sp = jnp.exp(-0.5 * jnp.sqrt(dp2))                         # exp(-dist / 2)
    sn = jnp.exp(-0.5 * jnp.sqrt(dn2))
    # ap = max(1 + m - sp, 0); logit_p = -ap * (sp - (1 - m)) * gamma
    # an = max(m + sn, 0);     logit_n =  an * (sn - m) * gamma
    logit_p = -jnp.maximum((1.0 + m) - sp, 0.0) * (sp - (1.0 - m)) * gamma
    logit_n = jnp.maximum(m + sn, 0.0) * (sn - m) * gamma

    if needs_mask:
        # Only emitted (statically) when the grid covers more rows than the real
        # batch; pad / OOB rows are pushed to -1e30 BEFORE the tile max/sum.
        row = (step * tile_rows
               + jax.lax.broadcasted_iota(jnp.int32, (r, _LANES), 0) * _LANES
               + jax.lax.broadcasted_iota(jnp.int32, (r, _LANES), 1))
        valid = row < n_valid
        logit_p = jnp.where(valid, logit_p, _NEG_BIG)
        logit_n = jnp.where(valid, logit_n, _NEG_BIG)

    def _online_lse_update(logit, max_ref, sum_ref):
        t_max = jnp.max(logit, axis=0, keepdims=True)                    # (1, 128)
        t_sum = jnp.sum(jnp.exp(logit - t_max), axis=0, keepdims=True)   # (1, 128)
        prev_max = max_ref[...]
        new_max = jnp.maximum(prev_max, t_max)
        sum_ref[...] = (sum_ref[...] * jnp.exp(prev_max - new_max)
                        + t_sum * jnp.exp(t_max - new_max))
        max_ref[...] = new_max

    _online_lse_update(logit_p, max_p_ref, sum_p_ref)
    _online_lse_update(logit_n, max_n_ref, sum_n_ref)


def circle_loss3(anchor, zp, zn, m=0.25, gamma=256.0, tile_rows=None):
    """Pallas implementation of CircleLoss3.forward (Euclidean manifold dist)."""
    n, d = anchor.shape
    itemsize = jnp.dtype(anchor.dtype).itemsize

    # Tiny batches: pad up to a single 128-row lane group (negligible copy;
    # large batches are never copied -- the ragged last tile is masked instead).
    n_rows = n
    if n_rows < _LANES:
        pad = _LANES - n_rows
        anchor = jnp.pad(anchor, ((0, pad), (0, 0)))
        zp = jnp.pad(zp, ((0, pad), (0, 0)))
        zn = jnp.pad(zn, ((0, pad), (0, 0)))
        n_rows = _LANES

    if tile_rows is not None:
        t = max(_LANES, (int(tile_rows) // _LANES) * _LANES)
    else:
        t = _choose_tile_rows(n_rows, d, itemsize)
    t = min(t, max(_LANES, (n_rows // _LANES) * _LANES))

    num_tiles = int(pl.cdiv(n_rows, t))
    needs_mask = (num_tiles * t != n)

    kernel = functools.partial(
        _circle_loss3_kernel,
        m=float(m), gamma=float(gamma), n_valid=int(n),
        tile_rows=int(t), needs_mask=bool(needs_mask))

    in_spec = pl.BlockSpec((t, d), lambda i: (i, 0))
    stat_spec = pl.BlockSpec((1, _LANES), lambda i: (0, 0))
    stat_shape = jax.ShapeDtypeStruct((1, _LANES), jnp.float32)

    in_buf_bytes = 3 * 2 * t * d * itemsize        # double-buffered input blocks
    inter_bytes = 4 * t * d * 4                    # live f32 intermediates
    vmem_limit = int(min(_vmem_capacity_bytes(),
                         max(32 << 20, in_buf_bytes + inter_bytes + (8 << 20))))

    max_p, max_n, sum_p, sum_n = pl.pallas_call(
        kernel,
        out_shape=(stat_shape, stat_shape, stat_shape, stat_shape),
        grid=(num_tiles,),
        in_specs=[in_spec, in_spec, in_spec],
        out_specs=(stat_spec, stat_spec, stat_spec, stat_spec),
        compiler_params=pltpu.CompilerParams(
            dimension_semantics=("arbitrary",),
            vmem_limit_bytes=vmem_limit),
        cost_estimate=pl.CostEstimate(
            flops=8 * n_rows * d,
            transcendentals=6 * n_rows,
            bytes_accessed=3 * n_rows * d * itemsize + 4 * _LANES * 4),
    )(anchor, zp, zn)

    # Exact cross-lane merge of the per-lane logsumexp stats + softplus.
    lane_max = jnp.concatenate([max_p, max_n], axis=0)         # (2, 128) [p; n]
    lane_sum = jnp.concatenate([sum_p, sum_n], axis=0)
    gmax = jnp.max(lane_max, axis=1)                           # (2,)
    # Relies on f32 underflow: exp(_NEG_BIG - gmax) == 0 exactly, so lanes that
    # only ever saw padded rows contribute nothing.
    gsum = jnp.sum(lane_sum * jnp.exp(lane_max - gmax[:, None]), axis=1)
    lse = gmax + jnp.log(gsum)                                 # [lse_p, lse_n]
    return jax.nn.softplus(lse[0] + lse[1])


def _reference_loss(anchor, zp, zn, m=0.25, gamma=256.0):
    """Plain-JAX reference for validation."""
    dp = jnp.linalg.norm(anchor - zp, axis=-1)
    dn = jnp.linalg.norm(anchor - zn, axis=-1)
    sp = jnp.exp(-dp / 2)
    sn = jnp.exp(-dn / 2)
    ap = jnp.maximum(-sp + 1 + m, 0.0)
    an = jnp.maximum(sn + m, 0.0)
    logit_p = -ap * (sp - (1 - m)) * gamma
    logit_n = an * (sn - m) * gamma
    x = jax.scipy.special.logsumexp(logit_n) + jax.scipy.special.logsumexp(logit_p)
    return jax.nn.softplus(x)


if __name__ == "__main__":
    m, gamma = 0.25, 256.0
    root = jax.random.PRNGKey(0)

    def make_case(key, n, d, p_scale, n_scale):
        k1, k2, k3 = jax.random.split(key, 3)
        anchor = jax.random.normal(k1, (n, d), dtype=jnp.float32)
        zp = anchor + p_scale * jax.random.normal(k2, (n, d), dtype=jnp.float32)
        zn = anchor + n_scale * jax.random.normal(k3, (n, d), dtype=jnp.float32)
        return anchor, zp, zn

    keys = jax.random.split(root, 3)

    # Case 1: tiny batch (8 pairs, 32-dim) -> single 128-row tile, pad rows masked.
    a1, zp1, zn1 = make_case(keys[0], 8, 32, 0.3, 0.05)
    loss1 = jax.block_until_ready(circle_loss3(a1, zp1, zn1, m=m, gamma=gamma))
    ref1 = _reference_loss(a1, zp1, zn1, m=m, gamma=gamma)
    assert jnp.allclose(loss1, ref1, rtol=1e-4, atol=1e-4), (loss1, ref1)

    # Case 2: N=100 (< 128) -> one tile with 28 masked pad rows.
    a2, zp2, zn2 = make_case(keys[1], 100, 32, 0.2, 0.4)
    loss2 = jax.block_until_ready(circle_loss3(a2, zp2, zn2, m=m, gamma=gamma))
    ref2 = _reference_loss(a2, zp2, zn2, m=m, gamma=gamma)
    assert jnp.allclose(loss2, ref2, rtol=1e-4, atol=1e-4), (loss2, ref2)

    # Case 3: N=300 with a forced 128-row tile -> 3 grid steps: streaming
    # online-logsumexp across tiles and an unpadded ragged last tile masked
    # in-kernel (no wrapper jnp.pad).
    a3, zp3, zn3 = make_case(keys[2], 300, 32, 0.1, 0.6)
    loss3 = jax.block_until_ready(
        circle_loss3(a3, zp3, zn3, m=m, gamma=gamma, tile_rows=128))
    ref3 = _reference_loss(a3, zp3, zn3, m=m, gamma=gamma)
    assert jnp.allclose(loss3, ref3, rtol=1e-4, atol=1e-4), (loss3, ref3)

    print("KERNEL_OK")
</pallas_src>

<mosaic_0001>
module attributes {stable_mosaic.version = 11 : i64} {
  func.func @_circle_loss3_kernel(%arg0: i32, %arg1: memref<128x32xf32, #tpu.memory_space<vmem>>, %arg2: memref<128x32xf32, #tpu.memory_space<vmem>>, %arg3: memref<128x32xf32, #tpu.memory_space<vmem>>, %arg4: memref<1x128xf32, #tpu.memory_space<vmem>>, %arg5: memref<1x128xf32, #tpu.memory_space<vmem>>, %arg6: memref<1x128xf32, #tpu.memory_space<vmem>>, %arg7: memref<1x128xf32, #tpu.memory_space<vmem>>) attributes {dimension_semantics = [#tpu.dimension_semantics<arbitrary>], iteration_bounds = array<i64: 1>, scalar_prefetch = 0 : i64, scratch_operands = 0 : i64, tpu.core_type = #tpu.core_type<tc>, window_params = [{transform_indices = @transform_0, window_bounds = array<i64: 128, 32>}, {transform_indices = @transform_1, window_bounds = array<i64: 128, 32>}, {transform_indices = @transform_2, window_bounds = array<i64: 128, 32>}, {pipeline_mode = #tpu.pipeline_mode<synchronous>, transform_indices = @transform_3, window_bounds = array<i64: 1, 128>}, {pipeline_mode = #tpu.pipeline_mode<synchronous>, transform_indices = @transform_4, window_bounds = array<i64: 1, 128>}, {pipeline_mode = #tpu.pipeline_mode<synchronous>, transform_indices = @transform_5, window_bounds = array<i64: 1, 128>}, {pipeline_mode = #tpu.pipeline_mode<synchronous>, transform_indices = @transform_6, window_bounds = array<i64: 1, 128>}]} {
    %c0_i32 = arith.constant 0 : i32
    %0 = arith.cmpi eq, %arg0, %c0_i32 : i32
    %1 = arith.extui %0 : i1 to i32
    %c0_i32_0 = arith.constant 0 : i32
    %2 = arith.cmpi ne, %1, %c0_i32_0 : i32
    scf.if %2 {
      %cst_41 = arith.constant -1.000000e+30 : f32
      %92 = vector.broadcast %cst_41 : f32 to vector<1x128xf32>
      %c0_42 = arith.constant 0 : index
      %c0_43 = arith.constant 0 : index
      %93 = vector.load %arg4[%c0_42, %c0_43] : memref<1x128xf32, #tpu.memory_space<vmem>>, vector<1x128xf32>
      tpu.vector_store %arg4[%c0_42, %c0_43], %92 {strides = array<i32>} : memref<1x128xf32, #tpu.memory_space<vmem>>, vector<1x128xf32>,
      %cst_44 = arith.constant -1.000000e+30 : f32
      %94 = vector.broadcast %cst_44 : f32 to vector<1x128xf32>
      %c0_45 = arith.constant 0 : index
      %c0_46 = arith.constant 0 : index
      %95 = vector.load %arg5[%c0_45, %c0_46] : memref<1x128xf32, #tpu.memory_space<vmem>>, vector<1x128xf32>
      tpu.vector_store %arg5[%c0_45, %c0_46], %94 {strides = array<i32>} : memref<1x128xf32, #tpu.memory_space<vmem>>, vector<1x128xf32>,
      %cst_47 = arith.constant 0.000000e+00 : f32
      %96 = vector.broadcast %cst_47 : f32 to vector<1x128xf32>
      %c0_48 = arith.constant 0 : index
      %c0_49 = arith.constant 0 : index
      %97 = vector.load %arg6[%c0_48, %c0_49] : memref<1x128xf32, #tpu.memory_space<vmem>>, vector<1x128xf32>
      tpu.vector_store %arg6[%c0_48, %c0_49], %96 {strides = array<i32>} : memref<1x128xf32, #tpu.memory_space<vmem>>, vector<1x128xf32>,
      %cst_50 = arith.constant 0.000000e+00 : f32
      %98 = vector.broadcast %cst_50 : f32 to vector<1x128xf32>
      %c0_51 = arith.constant 0 : index
      %c0_52 = arith.constant 0 : index
      %99 = vector.load %arg7[%c0_51, %c0_52] : memref<1x128xf32, #tpu.memory_space<vmem>>, vector<1x128xf32>
      tpu.vector_store %arg7[%c0_51, %c0_52], %98 {strides = array<i32>} : memref<1x128xf32, #tpu.memory_space<vmem>>, vector<1x128xf32>,
    } else {
    }
    %c0 = arith.constant 0 : index
    %c0_1 = arith.constant 0 : index
    %3 = vector.load %arg1[%c0, %c0_1] : memref<128x32xf32, #tpu.memory_space<vmem>>, vector<128x32xf32>
    %c0_2 = arith.constant 0 : index
    %c0_3 = arith.constant 0 : index
    %4 = vector.load %arg2[%c0_2, %c0_3] : memref<128x32xf32, #tpu.memory_space<vmem>>, vector<128x32xf32>
    %5 = arith.subf %3, %4 : vector<128x32xf32>
    %c0_4 = arith.constant 0 : index
    %c0_5 = arith.constant 0 : index
    %6 = vector.load %arg3[%c0_4, %c0_5] : memref<128x32xf32, #tpu.memory_space<vmem>>, vector<128x32xf32>
    %7 = arith.subf %3, %6 : vector<128x32xf32>
    %8 = arith.mulf %5, %5 : vector<128x32xf32>
    %9 = vector.shape_cast %8 : vector<128x32xf32> to vector<1x128x32xf32>
    %cst = arith.constant dense<0.000000e+00> : vector<1x128xf32>
    %10 = vector.multi_reduction <add>, %9, %cst [2] : vector<1x128x32xf32> to vector<1x128xf32>
    %11 = arith.mulf %7, %7 : vector<128x32xf32>
    %12 = vector.shape_cast %11 : vector<128x32xf32> to vector<1x128x32xf32>
    %cst_6 = arith.constant dense<0.000000e+00> : vector<1x128xf32>
    %13 = vector.multi_reduction <add>, %12, %cst_6 [2] : vector<1x128x32xf32> to vector<1x128xf32>
    %14 = math.sqrt %10 : vector<1x128xf32>
    %cst_7 = arith.constant -5.000000e-01 : f32
    %15 = vector.broadcast %cst_7 : f32 to vector<1x128xf32>
    %16 = arith.mulf %15, %14 : vector<1x128xf32>
    %17 = math.exp %16 : vector<1x128xf32>
    %18 = math.sqrt %13 : vector<1x128xf32>
    %cst_8 = arith.constant -5.000000e-01 : f32
    %19 = vector.broadcast %cst_8 : f32 to vector<1x128xf32>
    %20 = arith.mulf %19, %18 : vector<1x128xf32>
    %21 = math.exp %20 : vector<1x128xf32>
    %cst_9 = arith.constant 1.250000e+00 : f32
    %22 = vector.broadcast %cst_9 : f32 to vector<1x128xf32>
    %23 = arith.subf %22, %17 : vector<1x128xf32>
    %cst_10 = arith.constant 0.000000e+00 : f32
    %24 = vector.broadcast %cst_10 : f32 to vector<1x128xf32>
    %25 = arith.maximumf %23, %24 : vector<1x128xf32>
    %cst_11 = arith.constant 0.000000e+00 : f32
    %26 = vector.broadcast %cst_11 : f32 to vector<1x128xf32>
    %27 = arith.subf %26, %25 : vector<1x128xf32>
    %cst_12 = arith.constant 7.500000e-01 : f32
    %28 = vector.broadcast %cst_12 : f32 to vector<1x128xf32>
    %29 = arith.subf %17, %28 : vector<1x128xf32>
    %30 = arith.mulf %27, %29 : vector<1x128xf32>
    %cst_13 = arith.constant 2.560000e+02 : f32
    %31 = vector.broadcast %cst_13 : f32 to vector<1x128xf32>
    %32 = arith.mulf %30, %31 : vector<1x128xf32>
    %cst_14 = arith.constant 2.500000e-01 : f32
    %33 = vector.broadcast %cst_14 : f32 to vector<1x128xf32>
    %34 = arith.addf %33, %21 : vector<1x128xf32>
    %cst_15 = arith.constant 0.000000e+00 : f32
    %35 = vector.broadcast %cst_15 : f32 to vector<1x128xf32>
    %36 = arith.maximumf %34, %35 : vector<1x128xf32>
    %cst_16 = arith.constant 2.500000e-01 : f32
    %37 = vector.broadcast %cst_16 : f32 to vector<1x128xf32>
    %38 = arith.subf %21, %37 : vector<1x128xf32>
    %39 = arith.mulf %36, %38 : vector<1x128xf32>
    %cst_17 = arith.constant 2.560000e+02 : f32
    %40 = vector.broadcast %cst_17 : f32 to vector<1x128xf32>
    %41 = arith.mulf %39, %40 : vector<1x128xf32>
    %c128_i32 = arith.constant 128 : i32
    %42 = arith.muli %arg0, %c128_i32 : i32
    %43 = tpu.iota {dimensions = array<i32: 0>} : vector<1x128xi32>
    %c128_i32_18 = arith.constant 128 : i32
    %44 = vector.broadcast %c128_i32_18 : i32 to vector<1x128xi32>
    %45 = arith.muli %43, %44 : vector<1x128xi32>
    %46 = vector.broadcast %42 : i32 to vector<1x128xi32>
    %47 = arith.addi %46, %45 : vector<1x128xi32>
    %48 = tpu.iota {dimensions = array<i32: 1>} : vector<1x128xi32>
    %49 = arith.addi %47, %48 : vector<1x128xi32>
    %c8_i32 = arith.constant 8 : i32
    %50 = vector.broadcast %c8_i32 : i32 to vector<1x128xi32>
    %51 = arith.cmpi slt, %49, %50 : vector<1x128xi32>
    %cst_19 = arith.constant -1.000000e+30 : f32
    %52 = vector.broadcast %cst_19 : f32 to vector<1x128xf32>
    %53 = arith.select %51, %32, %52 : vector<1x128xi1>, vector<1x128xf32>
    %cst_20 = arith.constant -1.000000e+30 : f32
    %54 = vector.broadcast %cst_20 : f32 to vector<1x128xf32>
    %55 = arith.select %51, %41, %54 : vector<1x128xi1>, vector<1x128xf32>
    %cst_21 = arith.constant dense<0xFF800000> : vector<128xf32>
    %56 = vector.multi_reduction <maximumf>, %53, %cst_21 [0] : vector<1x128xf32> to vector<128xf32>
    %57 = vector.shape_cast %56 : vector<128xf32> to vector<1x128xf32>
    %58 = arith.subf %53, %57 : vector<1x128xf32>
    %59 = math.exp %58 : vector<1x128xf32>
    %cst_22 = arith.constant dense<0.000000e+00> : vector<128xf32>
    %60 = vector.multi_reduction <add>, %59, %cst_22 [0] : vector<1x128xf32> to vector<128xf32>
    %61 = vector.shape_cast %60 : vector<128xf32> to vector<1x128xf32>
    %c0_23 = arith.constant 0 : index
    %c0_24 = arith.constant 0 : index
    %62 = vector.load %arg4[%c0_23, %c0_24] : memref<1x128xf32, #tpu.memory_space<vmem>>, vector<1x128xf32>
    %63 = arith.maximumf %62, %57 : vector<1x128xf32>
    %c0_25 = arith.constant 0 : index
    %c0_26 = arith.constant 0 : index
    %64 = vector.load %arg6[%c0_25, %c0_26] : memref<1x128xf32, #tpu.memory_space<vmem>>, vector<1x128xf32>
    %65 = arith.subf %62, %63 : vector<1x128xf32>
    %66 = math.exp %65 : vector<1x128xf32>
    %67 = arith.mulf %64, %66 : vector<1x128xf32>
    %68 = arith.subf %57, %63 : vector<1x128xf32>
    %69 = math.exp %68 : vector<1x128xf32>
    %70 = arith.mulf %61, %69 : vector<1x128xf32>
    %71 = arith.addf %67, %70 : vector<1x128xf32>
    %c0_27 = arith.constant 0 : index
    %c0_28 = arith.constant 0 : index
    %72 = vector.load %arg6[%c0_27, %c0_28] : memref<1x128xf32, #tpu.memory_space<vmem>>, vector<1x128xf32>
    tpu.vector_store %arg6[%c0_27, %c0_28], %71 {strides = array<i32>} : memref<1x128xf32, #tpu.memory_space<vmem>>, vector<1x128xf32>,
    %c0_29 = arith.constant 0 : index
    %c0_30 = arith.constant 0 : index
    %73 = vector.load %arg4[%c0_29, %c0_30] : memref<1x128xf32, #tpu.memory_space<vmem>>, vector<1x128xf32>
    tpu.vector_store %arg4[%c0_29, %c0_30], %63 {strides = array<i32>} : memref<1x128xf32, #tpu.memory_space<vmem>>, vector<1x128xf32>,
    %cst_31 = arith.constant dense<0xFF800000> : vector<128xf32>
    %74 = vector.multi_reduction <maximumf>, %55, %cst_31 [0] : vector<1x128xf32> to vector<128xf32>
    %75 = vector.shape_cast %74 : vector<128xf32> to vector<1x128xf32>
    %76 = arith.subf %55, %75 : vector<1x128xf32>
    %77 = math.exp %76 : vector<1x128xf32>
    %cst_32 = arith.constant dense<0.000000e+00> : vector<128xf32>
    %78 = vector.multi_reduction <add>, %77, %cst_32 [0] : vector<1x128xf32> to vector<128xf32>
    %79 = vector.shape_cast %78 : vector<128xf32> to vector<1x128xf32>
    %c0_33 = arith.constant 0 : index
    %c0_34 = arith.constant 0 : index
    %80 = vector.load %arg5[%c0_33, %c0_34] : memref<1x128xf32, #tpu.memory_space<vmem>>, vector<1x128xf32>
    %81 = arith.maximumf %80, %75 : vector<1x128xf32>
    %c0_35 = arith.constant 0 : index
    %c0_36 = arith.constant 0 : index
    %82 = vector.load %arg7[%c0_35, %c0_36] : memref<1x128xf32, #tpu.memory_space<vmem>>, vector<1x128xf32>
    %83 = arith.subf %80, %81 : vector<1x128xf32>
    %84 = math.exp %83 : vector<1x128xf32>
    %85 = arith.mulf %82, %84 : vector<1x128xf32>
    %86 = arith.subf %75, %81 : vector<1x128xf32>
    %87 = math.exp %86 : vector<1x128xf32>
    %88 = arith.mulf %79, %87 : vector<1x128xf32>
    %89 = arith.addf %85, %88 : vector<1x128xf32>
    %c0_37 = arith.constant 0 : index
    %c0_38 = arith.constant 0 : index
    %90 = vector.load %arg7[%c0_37, %c0_38] : memref<1x128xf32, #tpu.memory_space<vmem>>, vector<1x128xf32>
    tpu.vector_store %arg7[%c0_37, %c0_38], %89 {strides = array<i32>} : memref<1x128xf32, #tpu.memory_space<vmem>>, vector<1x128xf32>,
    %c0_39 = arith.constant 0 : index
    %c0_40 = arith.constant 0 : index
    %91 = vector.load %arg5[%c0_39, %c0_40] : memref<1x128xf32, #tpu.memory_space<vmem>>, vector<1x128xf32>
    tpu.vector_store %arg5[%c0_39, %c0_40], %81 {strides = array<i32>} : memref<1x128xf32, #tpu.memory_space<vmem>>, vector<1x128xf32>,
    return
  }
  func.func @transform_0(%arg0: i32) -> (i32, i32) {
    %c0_i32 = arith.constant 0 : i32
    %c0_i32_0 = arith.constant 0 : i32
    return %arg0, %c0_i32 : i32, i32
  }
  func.func @transform_1(%arg0: i32) -> (i32, i32) {
    %c0_i32 = arith.constant 0 : i32
    %c0_i32_0 = arith.constant 0 : i32
    return %arg0, %c0_i32 : i32, i32
  }
  func.func @transform_2(%arg0: i32) -> (i32, i32) {
    %c0_i32 = arith.constant 0 : i32
    %c0_i32_0 = arith.constant 0 : i32
    return %arg0, %c0_i32 : i32, i32
  }
  func.func @transform_3(%arg0: i32) -> (i32, i32) {
    %c0_i32 = arith.constant 0 : i32
    %c0_i32_0 = arith.constant 0 : i32
    %c0_i32_1 = arith.constant 0 : i32
    return %c0_i32, %c0_i32_0 : i32, i32
  }
  func.func @transform_4(%arg0: i32) -> (i32, i32) {
    %c0_i32 = arith.constant 0 : i32
    %c0_i32_0 = arith.constant 0 : i32
    %c0_i32_1 = arith.constant 0 : i32
    return %c0_i32, %c0_i32_0 : i32, i32
  }
  func.func @transform_5(%arg0: i32) -> (i32, i32) {
    %c0_i32 = arith.constant 0 : i32
    %c0_i32_0 = arith.constant 0 : i32
    %c0_i32_1 = arith.constant 0 : i32
    return %c0_i32, %c0_i32_0 : i32, i32
  }
  func.func @transform_6(%arg0: i32) -> (i32, i32) {
    %c0_i32 = arith.constant 0 : i32
    %c0_i32_0 = arith.constant 0 : i32
    %c0_i32_1 = arith.constant 0 : i32
    return %c0_i32, %c0_i32_0 : i32, i32
  }
}

</mosaic_0001>

<llo_original>
// kernel: tpu_custom_call.1
$region0: #{tpu_custom_call.1}
  #allocation0 [shape = 'u32[]', space=smem, size = 0x4, offset = 0x4, fixed_abs, tag = 'smem constant byte address 0x4 - core index']
  #allocation1 [shape = 'u32[72,128]{1,0:T(1,128)}', space=vmem, size = 0x9000, scoped, tag = 'internal scratch']
  %s0 = inlined_call_operand.vmem [shape: f32[128,32], index: 0, kind: input, shape index: {}]
  %s1 = inlined_call_operand.vmem [shape: f32[128,32], index: 1, kind: input, shape index: {}]
  %s2 = inlined_call_operand.vmem [shape: f32[128,32], index: 2, kind: input, shape index: {}]
  %s3 = inlined_call_operand.hbm [shape: f32[1,128], index: 3, kind: output, shape index: {0}]
  %s4 = inlined_call_operand.hbm [shape: f32[1,128], index: 4, kind: output, shape index: {1}]
  %s5 = inlined_call_operand.hbm [shape: f32[1,128], index: 5, kind: output, shape index: {2}]
  %s6 = inlined_call_operand.hbm [shape: f32[1,128], index: 6, kind: output, shape index: {3}]
  %7 = xla_tuple %s3, %s4, %s5, %s6
  %s8 = sld [smem:[#allocation0]]
  $region50: #{tpu_custom_call.1} parent=0
    _
  %s10 = ssub.s32 1, %s8
  %s11 = scalar_select 0, %s10, %s8
  $region1: #{tpu_custom_call.1} parent=0
    #allocation2 [shape = 'u8[512]{0}', space=vmem, size = 0x400, scoped, tag = 'output window, operand 0, single buffered']
    #allocation3 [shape = 's32[1]{0}', space=sflag, size = 0x4, scoped, tag = 'scoped memory for tpu_custom_call.1']
    #allocation4 [shape = 'u8[512]{0}', space=vmem, size = 0x400, scoped, tag = 'output window, operand 1, single buffered']
    #allocation5 [shape = 's32[1]{0}', space=sflag, size = 0x4, scoped, tag = 'scoped memory for tpu_custom_call.1']
    #allocation6 [shape = 'u8[512]{0}', space=vmem, size = 0x400, scoped, tag = 'output window, operand 2, single buffered']
    #allocation7 [shape = 'u8[512]{0}', space=vmem, size = 0x400, scoped, tag = 'output window, operand 3, single buffered']
    #allocation8 [shape = 's32[1]{0}', space=sflag, size = 0x4, scoped, tag = 'scoped memory for tpu_custom_call.1']
    %12 = vsyncpa [#allocation3], 0
    %13 = vsyncpa [#allocation5], 0
    %14 = vsyncpa [#allocation8], 0
    // Predicated region
    $region2: #{tpu_custom_call.1} parent=1 // pred_check
      _
    $region3: #{tpu_custom_call.1} parent=1 // pred_check_branch
      %16 = sbr.rel (0) target = $region5
    $region4: #{tpu_custom_call.1} parent=1 // pred_region
      _
    $region5: #{tpu_custom_call.1} parent=1 // pred_fallthru
      _
    // Predicated region
    $region6: #{tpu_custom_call.1} parent=1 // pred_check
      _
    $region7: #{tpu_custom_call.1} parent=1 // pred_check_branch
      %18 = sbr.rel (0) target = $region9
    $region8: #{tpu_custom_call.1} parent=1 // pred_region
      _
    $region9: #{tpu_custom_call.1} parent=1 // pred_fallthru
      _
    // Predicated region
    $region10: #{tpu_custom_call.1} parent=1 // pred_check
      _
    $region11: #{tpu_custom_call.1} parent=1 // pred_check_branch
      %20 = sbr.rel (0) target = $region13
    $region12: #{tpu_custom_call.1} parent=1 // pred_region
      _
    $region13: #{tpu_custom_call.1} parent=1 // pred_fallthru
      _
    %p21 = scmp.eq.s32.totalorder 0, 0
    // Predicated region
    $region14: #{tpu_custom_call.1} parent=1 // pred_check
      %p22 = pneg %p21
    $region15: #{tpu_custom_call.1} parent=1 // pred_check_branch
      %24 = sbr.rel (%p22) target = $region17
    $region16: #{tpu_custom_call.1} parent=1 // pred_region
      %25 = vst [vmem:[#allocation2] sm:$0x1] -1e+30
      %26 = vst [vmem:[#allocation4] sm:$0x1] -1e+30
      %27 = vst [vmem:[#allocation6] sm:$0x1] 0.0
      %28 = vst [vmem:[#allocation7] sm:$0x1] 0.0
    $region17: #{tpu_custom_call.1} parent=1 // pred_fallthru
      _
    %v29 = vld [vmem:[%s0] sm:$0xff]
    %v30 = vld [vmem:[%s0 + $0x8] sm:$0xff]
    %v31 = vld [vmem:[%s0 + $0x10] sm:$0xff]
    %v32 = vld [vmem:[%s0 + $0x18] sm:$0xff]
    %v33 = vld [vmem:[%s0 + $0x20] sm:$0xff]
    %v34 = vld [vmem:[%s0 + $0x28] sm:$0xff]
    %v35 = vld [vmem:[%s0 + $0x30] sm:$0xff]
    %v36 = vld [vmem:[%s0 + $0x38] sm:$0xff]
    %v37 = vld [vmem:[%s0 + $0x40] sm:$0xff]
    %v38 = vld [vmem:[%s0 + $0x48] sm:$0xff]
    %v39 = vld [vmem:[%s0 + $0x50] sm:$0xff]
    %v40 = vld [vmem:[%s0 + $0x58] sm:$0xff]
    %v41 = vld [vmem:[%s0 + $0x60] sm:$0xff]
    %v42 = vld [vmem:[%s0 + $0x68] sm:$0xff]
    %v43 = vld [vmem:[%s0 + $0x70] sm:$0xff]
    %v44 = vld [vmem:[%s0 + $0x78] sm:$0xff]
    %v45 = vld [vmem:[%s1] sm:$0xff]
    %v46 = vld [vmem:[%s1 + $0x8] sm:$0xff]
    %v47 = vld [vmem:[%s1 + $0x10] sm:$0xff]
    %v48 = vld [vmem:[%s1 + $0x18] sm:$0xff]
    %v49 = vld [vmem:[%s1 + $0x20] sm:$0xff]
    %v50 = vld [vmem:[%s1 + $0x28] sm:$0xff]
    %v51 = vld [vmem:[%s1 + $0x30] sm:$0xff]
    %v52 = vld [vmem:[%s1 + $0x38] sm:$0xff]
    %v53 = vld [vmem:[%s1 + $0x40] sm:$0xff]
    %v54 = vld [vmem:[%s1 + $0x48] sm:$0xff]
    %v55 = vld [vmem:[%s1 + $0x50] sm:$0xff]
    %v56 = vld [vmem:[%s1 + $0x58] sm:$0xff]
    %v57 = vld [vmem:[%s1 + $0x60] sm:$0xff]
    %v58 = vld [vmem:[%s1 + $0x68] sm:$0xff]
    %v59 = vld [vmem:[%s1 + $0x70] sm:$0xff]
    %v60 = vld [vmem:[%s1 + $0x78] sm:$0xff]
    %v61 = vsub.f32 %v29, %v45
    %v62 = vsub.f32 %v30, %v46
    %v63 = vsub.f32 %v31, %v47
    %v64 = vsub.f32 %v32, %v48
    %v65 = vsub.f32 %v33, %v49
    %v66 = vsub.f32 %v34, %v50
    %v67 = vsub.f32 %v35, %v51
    %v68 = vsub.f32 %v36, %v52
    %v69 = vsub.f32 %v37, %v53
    %v70 = vsub.f32 %v38, %v54
    %v71 = vsub.f32 %v39, %v55
    %v72 = vsub.f32 %v40, %v56
    %v73 = vsub.f32 %v41, %v57
    %v74 = vsub.f32 %v42, %v58
    %v75 = vsub.f32 %v43, %v59
    %v76 = vsub.f32 %v44, %v60
    %v77 = vld [vmem:[%s2] sm:$0xff]
    %v78 = vld [vmem:[%s2 + $0x8] sm:$0xff]
    %v79 = vld [vmem:[%s2 + $0x10] sm:$0xff]
    %v80 = vld [vmem:[%s2 + $0x18] sm:$0xff]
    %v81 = vld [vmem:[%s2 + $0x20] sm:$0xff]
    %v82 = vld [vmem:[%s2 + $0x28] sm:$0xff]
    %v83 = vld [vmem:[%s2 + $0x30] sm:$0xff]
    %v84 = vld [vmem:[%s2 + $0x38] sm:$0xff]
    %v85 = vld [vmem:[%s2 + $0x40] sm:$0xff]
    %v86 = vld [vmem:[%s2 + $0x48] sm:$0xff]
    %v87 = vld [vmem:[%s2 + $0x50] sm:$0xff]
    %v88 = vld [vmem:[%s2 + $0x58] sm:$0xff]
    %v89 = vld [vmem:[%s2 + $0x60] sm:$0xff]
    %v90 = vld [vmem:[%s2 + $0x68] sm:$0xff]
    %v91 = vld [vmem:[%s2 + $0x70] sm:$0xff]
    %v92 = vld [vmem:[%s2 + $0x78] sm:$0xff]
    %v93 = vsub.f32 %v29, %v77
    %v94 = vsub.f32 %v30, %v78
    %v95 = vsub.f32 %v31, %v79
    %v96 = vsub.f32 %v32, %v80
    %v97 = vsub.f32 %v33, %v81
    %v98 = vsub.f32 %v34, %v82
    %v99 = vsub.f32 %v35, %v83
    %v100 = vsub.f32 %v36, %v84
    %v101 = vsub.f32 %v37, %v85
    %v102 = vsub.f32 %v38, %v86
    %v103 = vsub.f32 %v39, %v87
    %v104 = vsub.f32 %v40, %v88
    %v105 = vsub.f32 %v41, %v89
    %v106 = vsub.f32 %v42, %v90
    %v107 = vsub.f32 %v43, %v91
    %v108 = vsub.f32 %v44, %v92
    %v109 = vmul.f32 %v61, %v61
    %v110 = vmul.f32 %v62, %v62
    %v111 = vmul.f32 %v63, %v63
    %v112 = vmul.f32 %v64, %v64
    %v113 = vmul.f32 %v65, %v65
    %v114 = vmul.f32 %v66, %v66
    %v115 = vmul.f32 %v67, %v67
    %v116 = vmul.f32 %v68, %v68
    %v117 = vmul.f32 %v69, %v69
    %v118 = vmul.f32 %v70, %v70
    %v119 = vmul.f32 %v71, %v71
    %v120 = vmul.f32 %v72, %v72
    %v121 = vmul.f32 %v73, %v73
    %v122 = vmul.f32 %v74, %v74
    %v123 = vmul.f32 %v75, %v75
    %v124 = vmul.f32 %v76, %v76
    %vm125 = vcmask 261120
    %v126 = vsel %vm125, %v109, 0.0
    %127 = vadd.xlane.f32.xlu0 %v126
    %v128 = vpop.xlane.xlu0 %127
    %v129 = vsel %vm125, %v110, 0.0
    %130 = vadd.xlane.f32.xlu0 %v129
    %v131 = vpop.xlane.xlu0 %130
    %v132 = vsel %vm125, %v111, 0.0
    %133 = vadd.xlane.f32.xlu0 %v132
    %v134 = vpop.xlane.xlu0 %133
    %v135 = vsel %vm125, %v112, 0.0
    %136 = vadd.xlane.f32.xlu0 %v135
    %v137 = vpop.xlane.xlu0 %136
    %v138 = vsel %vm125, %v113, 0.0
    %139 = vadd.xlane.f32.xlu0 %v138
    %v140 = vpop.xlane.xlu0 %139
    %v141 = vsel %vm125, %v114, 0.0
    %142 = vadd.xlane.f32.xlu0 %v141
    %v143 = vpop.xlane.xlu0 %142
    %v144 = vsel %vm125, %v115, 0.0
    %145 = vadd.xlane.f32.xlu0 %v144
    %v146 = vpop.xlane.xlu0 %145
    %v147 = vsel %vm125, %v116, 0.0
    %148 = vadd.xlane.f32.xlu0 %v147
    %v149 = vpop.xlane.xlu0 %148
    %v150 = vsel %vm125, %v117, 0.0
    %151 = vadd.xlane.f32.xlu0 %v150
    %v152 = vpop.xlane.xlu0 %151
    %v153 = vsel %vm125, %v118, 0.0
    %154 = vadd.xlane.f32.xlu0 %v153
    %v155 = vpop.xlane.xlu0 %154
    %v156 = vsel %vm125, %v119, 0.0
    %157 = vadd.xlane.f32.xlu0 %v156
    %v158 = vpop.xlane.xlu0 %157
    %v159 = vsel %vm125, %v120, 0.0
    %160 = vadd.xlane.f32.xlu0 %v159
    %v161 = vpop.xlane.xlu0 %160
    %v162 = vsel %vm125, %v121, 0.0
    %163 = vadd.xlane.f32.xlu0 %v162
    %v164 = vpop.xlane.xlu0 %163
    %v165 = vsel %vm125, %v122, 0.0
    %166 = vadd.xlane.f32.xlu0 %v165
    %v167 = vpop.xlane.xlu0 %166
    %v168 = vsel %vm125, %v123, 0.0
    %169 = vadd.xlane.f32.xlu0 %v168
    %v170 = vpop.xlane.xlu0 %169
    %v171 = vsel %vm125, %v124, 0.0
    %172 = vadd.xlane.f32.xlu0 %v171
    %v173 = vpop.xlane.xlu0 %172
    %v174 = vmul.f32 %v93, %v93
    %v175 = vmul.f32 %v94, %v94
    %v176 = vmul.f32 %v95, %v95
    %v177 = vmul.f32 %v96, %v96
    %v178 = vmul.f32 %v97, %v97
    %v179 = vmul.f32 %v98, %v98
    %v180 = vmul.f32 %v99, %v99
    %v181 = vmul.f32 %v100, %v100
    %v182 = vmul.f32 %v101, %v101
    %v183 = vmul.f32 %v102, %v102
    %v184 = vmul.f32 %v103, %v103
    %v185 = vmul.f32 %v104, %v104
    %v186 = vmul.f32 %v105, %v105
    %v187 = vmul.f32 %v106, %v106
    %v188 = vmul.f32 %v107, %v107
    %v189 = vmul.f32 %v108, %v108
    %v190 = vsel %vm125, %v174, 0.0
    %191 = vadd.xlane.f32.xlu0 %v190
    %v192 = vpop.xlane.xlu0 %191
    %v193 = vsel %vm125, %v175, 0.0
    %194 = vadd.xlane.f32.xlu0 %v193
    %v195 = vpop.xlane.xlu0 %194
    %v196 = vsel %vm125, %v176, 0.0
    %197 = vadd.xlane.f32.xlu0 %v196
    %v198 = vpop.xlane.xlu0 %197
    %v199 = vsel %vm125, %v177, 0.0
    %200 = vadd.xlane.f32.xlu0 %v199
    %v201 = vpop.xlane.xlu0 %200
    %v202 = vsel %vm125, %v178, 0.0
    %203 = vadd.xlane.f32.xlu0 %v202
    %v204 = vpop.xlane.xlu0 %203
    %v205 = vsel %vm125, %v179, 0.0
    %206 = vadd.xlane.f32.xlu0 %v205
    %v207 = vpop.xlane.xlu0 %206
    %v208 = vsel %vm125, %v180, 0.0
    %209 = vadd.xlane.f32.xlu0 %v208
    %v210 = vpop.xlane.xlu0 %209
    %v211 = vsel %vm125, %v181, 0.0
    %212 = vadd.xlane.f32.xlu0 %v211
    %v213 = vpop.xlane.xlu0 %212
    %v214 = vsel %vm125, %v182, 0.0
    %215 = vadd.xlane.f32.xlu0 %v214
    %v216 = vpop.xlane.xlu0 %215
    %v217 = vsel %vm125, %v183, 0.0
    %218 = vadd.xlane.f32.xlu0 %v217
    %v219 = vpop.xlane.xlu0 %218
    %v220 = vsel %vm125, %v184, 0.0
    %221 = vadd.xlane.f32.xlu0 %v220
    %v222 = vpop.xlane.xlu0 %221
    %v223 = vsel %vm125, %v185, 0.0
    %224 = vadd.xlane.f32.xlu0 %v223
    %v225 = vpop.xlane.xlu0 %224
    %v226 = vsel %vm125, %v186, 0.0
    %227 = vadd.xlane.f32.xlu0 %v226
    %v228 = vpop.xlane.xlu0 %227
    %v229 = vsel %vm125, %v187, 0.0
    %230 = vadd.xlane.f32.xlu0 %v229
    %v231 = vpop.xlane.xlu0 %230
    %v232 = vsel %vm125, %v188, 0.0
    %233 = vadd.xlane.f32.xlu0 %v232
    %v234 = vpop.xlane.xlu0 %233
    %v235 = vsel %vm125, %v189, 0.0
    %236 = vadd.xlane.f32.xlu0 %v235
    %v237 = vpop.xlane.xlu0 %236
    %v238 = vrsqrt.pop %v128
    %v239 = vmul.f32 %v238, %v128
    %v240 = vmul.f32 %v239, %v238
    %v241 = vmul.f32 0.5, %v240
    %v242 = vsub.f32 1.5, %v241
    %v243 = vmul.f32 %v238, %v242
    %v244 = vmul.f32 %v128, %v243
    %vm245 = vcmp.eq.f32.partialorder %v128, inf
    %v246 = vsel %vm245, %v128, %v244
    %vm247 = vcmp.eq.f32.partialorder %v128, 0.0
    %v248 = vand.u32 %v128, 2147483648
    %v249 = vsel %vm247, %v248, %v246
    %v250 = vrsqrt.pop %v131
    %v251 = vmul.f32 %v250, %v131
    %v252 = vmul.f32 %v251, %v250
    %v253 = vmul.f32 0.5, %v252
    %v254 = vsub.f32 1.5, %v253
    %v255 = vmul.f32 %v250, %v254
    %v256 = vmul.f32 %v131, %v255
    %vm257 = vcmp.eq.f32.partialorder %v131, inf
    %v258 = vsel %vm257, %v131, %v256
    %vm259 = vcmp.eq.f32.partialorder %v131, 0.0
    %v260 = vand.u32 %v131, 2147483648
    %v261 = vsel %vm259, %v260, %v258
    %v262 = vrsqrt.pop %v134
    %v263 = vmul.f32 %v262, %v134
    %v264 = vmul.f32 %v263, %v262
    %v265 = vmul.f32 0.5, %v264
    %v266 = vsub.f32 1.5, %v265
    %v267 = vmul.f32 %v262, %v266
    %v268 = vmul.f32 %v134, %v267
    %vm269 = vcmp.eq.f32.partialorder %v134, inf
    %v270 = vsel %vm269, %v134, %v268
    %vm271 = vcmp.eq.f32.partialorder %v134, 0.0
    %v272 = vand.u32 %v134, 2147483648
    %v273 = vsel %vm271, %v272, %v270
    %v274 = vrsqrt.pop %v137
    %v275 = vmul.f32 %v274, %v137
    %v276 = vmul.f32 %v275, %v274
    %v277 = vmul.f32 0.5, %v276
    %v278 = vsub.f32 1.5, %v277
    %v279 = vmul.f32 %v274, %v278
    %v280 = vmul.f32 %v137, %v279
    %vm281 = vcmp.eq.f32.partialorder %v137, inf
    %v282 = vsel %vm281, %v137, %v280
    %vm283 = vcmp.eq.f32.partialorder %v137, 0.0
    %v284 = vand.u32 %v137, 2147483648
    %v285 = vsel %vm283, %v284, %v282
    %v286 = vrsqrt.pop %v140
    %v287 = vmul.f32 %v286, %v140
    %v288 = vmul.f32 %v287, %v286
    %v289 = vmul.f32 0.5, %v288
    %v290 = vsub.f32 1.5, %v289
    %v291 = vmul.f32 %v286, %v290
    %v292 = vmul.f32 %v140, %v291
    %vm293 = vcmp.eq.f32.partialorder %v140, inf
    %v294 = vsel %vm293, %v140, %v292
    %vm295 = vcmp.eq.f32.partialorder %v140, 0.0
    %v296 = vand.u32 %v140, 2147483648
    %v297 = vsel %vm295, %v296, %v294
    %v298 = vrsqrt.pop %v143
    %v299 = vmul.f32 %v298, %v143
    %v300 = vmul.f32 %v299, %v298
    %v301 = vmul.f32 0.5, %v300
    %v302 = vsub.f32 1.5, %v301
    %v303 = vmul.f32 %v298, %v302
    %v304 = vmul.f32 %v143, %v303
    %vm305 = vcmp.eq.f32.partialorder %v143, inf
    %v306 = vsel %vm305, %v143, %v304
    %vm307 = vcmp.eq.f32.partialorder %v143, 0.0
    %v308 = vand.u32 %v143, 2147483648
    %v309 = vsel %vm307, %v308, %v306
    %v310 = vrsqrt.pop %v146
    %v311 = vmul.f32 %v310, %v146
    %v312 = vmul.f32 %v311, %v310
    %v313 = vmul.f32 0.5, %v312
    %v314 = vsub.f32 1.5, %v313
    %v315 = vmul.f32 %v310, %v314
    %v316 = vmul.f32 %v146, %v315
    %vm317 = vcmp.eq.f32.partialorder %v146, inf
    %v318 = vsel %vm317, %v146, %v316
    %vm319 = vcmp.eq.f32.partialorder %v146, 0.0
    %v320 = vand.u32 %v146, 2147483648
    %v321 = vsel %vm319, %v320, %v318
    %v322 = vrsqrt.pop %v149
    %v323 = vmul.f32 %v322, %v149
    %v324 = vmul.f32 %v323, %v322
    %v325 = vmul.f32 0.5, %v324
    %v326 = vsub.f32 1.5, %v325
    %v327 = vmul.f32 %v322, %v326
    %v328 = vmul.f32 %v149, %v327
    %vm329 = vcmp.eq.f32.partialorder %v149, inf
    %v330 = vsel %vm329, %v149, %v328
    %vm331 = vcmp.eq.f32.partialorder %v149, 0.0
    %v332 = vand.u32 %v149, 2147483648
    %v333 = vsel %vm331, %v332, %v330
    %v334 = vrsqrt.pop %v152
    %v335 = vmul.f32 %v334, %v152
    %v336 = vmul.f32 %v335, %v334
    %v337 = vmul.f32 0.5, %v336
    %v338 = vsub.f32 1.5, %v337
    %v339 = vmul.f32 %v334, %v338
    %v340 = vmul.f32 %v152, %v339
    %vm341 = vcmp.eq.f32.partialorder %v152, inf
    %v342 = vsel %vm341, %v152, %v340
    %vm343 = vcmp.eq.f32.partialorder %v152, 0.0
    %v344 = vand.u32 %v152, 2147483648
    %v345 = vsel %vm343, %v344, %v342
    %v346 = vrsqrt.pop %v155
    %v347 = vmul.f32 %v346, %v155
    %v348 = vmul.f32 %v347, %v346
    %v349 = vmul.f32 0.5, %v348
    %v350 = vsub.f32 1.5, %v349
    %v351 = vmul.f32 %v346, %v350
    %v352 = vmul.f32 %v155, %v351
    %vm353 = vcmp.eq.f32.partialorder %v155, inf
    %v354 = vsel %vm353, %v155, %v352
    %vm355 = vcmp.eq.f32.partialorder %v155, 0.0
    %v356 = vand.u32 %v155, 2147483648
    %v357 = vsel %vm355, %v356, %v354
    %v358 = vrsqrt.pop %v158
    %v359 = vmul.f32 %v358, %v158
    %v360 = vmul.f32 %v359, %v358
    %v361 = vmul.f32 0.5, %v360
    %v362 = vsub.f32 1.5, %v361
    %v363 = vmul.f32 %v358, %v362
    %v364 = vmul.f32 %v158, %v363
    %vm365 = vcmp.eq.f32.partialorder %v158, inf
    %v366 = vsel %vm365, %v158, %v364
    %vm367 = vcmp.eq.f32.partialorder %v158, 0.0
    %v368 = vand.u32 %v158, 2147483648
    %v369 = vsel %vm367, %v368, %v366
    %v370 = vrsqrt.pop %v161
    %v371 = vmul.f32 %v370, %v161
    %v372 = vmul.f32 %v371, %v370
    %v373 = vmul.f32 0.5, %v372
    %v374 = vsub.f32 1.5, %v373
    %v375 = vmul.f32 %v370, %v374
    %v376 = vmul.f32 %v161, %v375
    %vm377 = vcmp.eq.f32.partialorder %v161, inf
    %v378 = vsel %vm377, %v161, %v376
    %vm379 = vcmp.eq.f32.partialorder %v161, 0.0
    %v380 = vand.u32 %v161, 2147483648
    %v381 = vsel %vm379, %v380, %v378
    %v382 = vrsqrt.pop %v164
    %v383 = vmul.f32 %v382, %v164
    %v384 = vmul.f32 %v383, %v382
    %v385 = vmul.f32 0.5, %v384
    %v386 = vsub.f32 1.5, %v385
    %v387 = vmul.f32 %v382, %v386
    %v388 = vmul.f32 %v164, %v387
    %vm389 = vcmp.eq.f32.partialorder %v164, inf
    %v390 = vsel %vm389, %v164, %v388
    %vm391 = vcmp.eq.f32.partialorder %v164, 0.0
    %v392 = vand.u32 %v164, 2147483648
    %v393 = vsel %vm391, %v392, %v390
    %v394 = vrsqrt.pop %v167
    %v395 = vmul.f32 %v394, %v167
    %v396 = vmul.f32 %v395, %v394
    %v397 = vmul.f32 0.5, %v396
    %v398 = vsub.f32 1.5, %v397
    %v399 = vmul.f32 %v394, %v398
    %v400 = vmul.f32 %v167, %v399
    %vm401 = vcmp.eq.f32.partialorder %v167, inf
    %v402 = vsel %vm401, %v167, %v400
    %vm403 = vcmp.eq.f32.partialorder %v167, 0.0
    %v404 = vand.u32 %v167, 2147483648
    %v405 = vsel %vm403, %v404, %v402
    %v406 = vrsqrt.pop %v170
    %v407 = vmul.f32 %v406, %v170
    %v408 = vmul.f32 %v407, %v406
    %v409 = vmul.f32 0.5, %v408
    %v410 = vsub.f32 1.5, %v409
    %v411 = vmul.f32 %v406, %v410
    %v412 = vmul.f32 %v170, %v411
    %vm413 = vcmp.eq.f32.partialorder %v170, inf
    %v414 = vsel %vm413, %v170, %v412
    %vm415 = vcmp.eq.f32.partialorder %v170, 0.0
    %v416 = vand.u32 %v170, 2147483648
    %v417 = vsel %vm415, %v416, %v414
    %v418 = vrsqrt.pop %v173
    %v419 = vmul.f32 %v418, %v173
    %v420 = vmul.f32 %v419, %v418
    %v421 = vmul.f32 0.5, %v420
    %v422 = vsub.f32 1.5, %v421
    %v423 = vmul.f32 %v418, %v422
    %v424 = vmul.f32 %v173, %v423
    %vm425 = vcmp.eq.f32.partialorder %v173, inf
    %v426 = vsel %vm425, %v173, %v424
    %vm427 = vcmp.eq.f32.partialorder %v173, 0.0
    %v428 = vand.u32 %v173, 2147483648
    %v429 = vsel %vm427, %v428, %v426
    %v430 = vmul.f32 %v249, -0.5
    %v431 = vmul.f32 %v261, -0.5
    %v432 = vmul.f32 %v273, -0.5
    %v433 = vmul.f32 %v285, -0.5
    %v434 = vmul.f32 %v297, -0.5
    %v435 = vmul.f32 %v309, -0.5
    %v436 = vmul.f32 %v321, -0.5
    %v437 = vmul.f32 %v333, -0.5
    %v438 = vmul.f32 %v345, -0.5
    %v439 = vmul.f32 %v357, -0.5
    %v440 = vmul.f32 %v369, -0.5
    %v441 = vmul.f32 %v381, -0.5
    %v442 = vmul.f32 %v393, -0.5
    %v443 = vmul.f32 %v405, -0.5
    %v444 = vmul.f32 %v417, -0.5
    %v445 = vmul.f32 %v429, -0.5
    %v446 = vmul.f32 %v430, 1.442695
    %v447 = vpow.pop %v446
    %v448 = vmul.f32 %v431, 1.442695
    %v449 = vpow.pop %v448
    %v450 = vmul.f32 %v432, 1.442695
    %v451 = vpow.pop %v450
    %v452 = vmul.f32 %v433, 1.442695
    %v453 = vpow.pop %v452
    %v454 = vmul.f32 %v434, 1.442695
    %v455 = vpow.pop %v454
    %v456 = vmul.f32 %v435, 1.442695
    %v457 = vpow.pop %v456
    %v458 = vmul.f32 %v436, 1.442695
    %v459 = vpow.pop %v458
    %v460 = vmul.f32 %v437, 1.442695
    %v461 = vpow.pop %v460
    %v462 = vmul.f32 %v438, 1.442695
    %v463 = vpow.pop %v462
    %v464 = vmul.f32 %v439, 1.442695
    %v465 = vpow.pop %v464
    %v466 = vmul.f32 %v440, 1.442695
    %v467 = vpow.pop %v466
    %v468 = vmul.f32 %v441, 1.442695
    %v469 = vpow.pop %v468
    %v470 = vmul.f32 %v442, 1.442695
    %v471 = vpow.pop %v470
    %v472 = vmul.f32 %v443, 1.442695
    %v473 = vpow.pop %v472
    %v474 = vmul.f32 %v444, 1.442695
    %v475 = vpow.pop %v474
    %v476 = vmul.f32 %v445, 1.442695
    %v477 = vpow.pop %v476
    %v478 = vrsqrt.pop %v192
    %v479 = vmul.f32 %v478, %v192
    %v480 = vmul.f32 %v479, %v478
    %v481 = vmul.f32 0.5, %v480
    %v482 = vsub.f32 1.5, %v481
    %v483 = vmul.f32 %v478, %v482
    %v484 = vmul.f32 %v192, %v483
    %vm485 = vcmp.eq.f32.partialorder %v192, inf
    %v486 = vsel %vm485, %v192, %v484
    %vm487 = vcmp.eq.f32.partialorder %v192, 0.0
    %v488 = vand.u32 %v192, 2147483648
    %v489 = vsel %vm487, %v488, %v486
    %v490 = vrsqrt.pop %v195
    %v491 = vmul.f32 %v490, %v195
    %v492 = vmul.f32 %v491, %v490
    %v493 = vmul.f32 0.5, %v492
    %v494 = vsub.f32 1.5, %v493
    %v495 = vmul.f32 %v490, %v494
    %v496 = vmul.f32 %v195, %v495
    %vm497 = vcmp.eq.f32.partialorder %v195, inf
    %v498 = vsel %vm497, %v195, %v496
    %vm499 = vcmp.eq.f32.partialorder %v195, 0.0
    %v500 = vand.u32 %v195, 2147483648
    %v501 = vsel %vm499, %v500, %v498
    %v502 = vrsqrt.pop %v198
    %v503 = vmul.f32 %v502, %v198
    %v504 = vmul.f32 %v503, %v502
    %v505 = vmul.f32 0.5, %v504
    %v506 = vsub.f32 1.5, %v505
    %v507 = vmul.f32 %v502, %v506
    %v508 = vmul.f32 %v198, %v507
    %vm509 = vcmp.eq.f32.partialorder %v198, inf
    %v510 = vsel %vm509, %v198, %v508
    %vm511 = vcmp.eq.f32.partialorder %v198, 0.0
    %v512 = vand.u32 %v198, 2147483648
    %v513 = vsel %vm511, %v512, %v510
    %v514 = vrsqrt.pop %v201
    %v515 = vmul.f32 %v514, %v201
    %v516 = vmul.f32 %v515, %v514
    %v517 = vmul.f32 0.5, %v516
    %v518 = vsub.f32 1.5, %v517
    %v519 = vmul.f32 %v514, %v518
    %v520 = vmul.f32 %v201, %v519
    %vm521 = vcmp.eq.f32.partialorder %v201, inf
    %v522 = vsel %vm521, %v201, %v520
    %vm523 = vcmp.eq.f32.partialorder %v201, 0.0
    %v524 = vand.u32 %v201, 2147483648
    %v525 = vsel %vm523, %v524, %v522
    %v526 = vrsqrt.pop %v204
    %v527 = vmul.f32 %v526, %v204
    %v528 = vmul.f32 %v527, %v526
    %v529 = vmul.f32 0.5, %v528
    %v530 = vsub.f32 1.5, %v529
    %v531 = vmul.f32 %v526, %v530
    %v532 = vmul.f32 %v204, %v531
    %vm533 = vcmp.eq.f32.partialorder %v204, inf
    %v534 = vsel %vm533, %v204, %v532
    %vm535 = vcmp.eq.f32.partialorder %v204, 0.0
    %v536 = vand.u32 %v204, 2147483648
    %v537 = vsel %vm535, %v536, %v534
    %v538 = vrsqrt.pop %v207
    %v539 = vmul.f32 %v538, %v207
    %v540 = vmul.f32 %v539, %v538
    %v541 = vmul.f32 0.5, %v540
    %v542 = vsub.f32 1.5, %v541
    %v543 = vmul.f32 %v538, %v542
    %v544 = vmul.f32 %v207, %v543
    %vm545 = vcmp.eq.f32.partialorder %v207, inf
    %v546 = vsel %vm545, %v207, %v544
    %vm547 = vcmp.eq.f32.partialorder %v207, 0.0
    %v548 = vand.u32 %v207, 2147483648
    %v549 = vsel %vm547, %v548, %v546
    %v550 = vrsqrt.pop %v210
    %v551 = vmul.f32 %v550, %v210
    %v552 = vmul.f32 %v551, %v550
    %v553 = vmul.f32 0.5, %v552
    %v554 = vsub.f32 1.5, %v553
    %v555 = vmul.f32 %v550, %v554
    %v556 = vmul.f32 %v210, %v555
    %vm557 = vcmp.eq.f32.partialorder %v210, inf
    %v558 = vsel %vm557, %v210, %v556
    %vm559 = vcmp.eq.f32.partialorder %v210, 0.0
    %v560 = vand.u32 %v210, 2147483648
    %v561 = vsel %vm559, %v560, %v558
    %v562 = vrsqrt.pop %v213
    %v563 = vmul.f32 %v562, %v213
    %v564 = vmul.f32 %v563, %v562
    %v565 = vmul.f32 0.5, %v564
    %v566 = vsub.f32 1.5, %v565
    %v567 = vmul.f32 %v562, %v566
    %v568 = vmul.f32 %v213, %v567
    %vm569 = vcmp.eq.f32.partialorder %v213, inf
    %v570 = vsel %vm569, %v213, %v568
    %vm571 = vcmp.eq.f32.partialorder %v213, 0.0
    %v572 = vand.u32 %v213, 2147483648
    %v573 = vsel %vm571, %v572, %v570
    %v574 = vrsqrt.pop %v216
    %v575 = vmul.f32 %v574, %v216
    %v576 = vmul.f32 %v575, %v574
    %v577 = vmul.f32 0.5, %v576
    %v578 = vsub.f32 1.5, %v577
    %v579 = vmul.f32 %v574, %v578
    %v580 = vmul.f32 %v216, %v579
    %vm581 = vcmp.eq.f32.partialorder %v216, inf
    %v582 = vsel %vm581, %v216, %v580
    %vm583 = vcmp.eq.f32.partialorder %v216, 0.0
    %v584 = vand.u32 %v216, 2147483648
    %v585 = vsel %vm583, %v584, %v582
    %v586 = vrsqrt.pop %v219
    %v587 = vmul.f32 %v586, %v219
    %v588 = vmul.f32 %v587, %v586
    %v589 = vmul.f32 0.5, %v588
    %v590 = vsub.f32 1.5, %v589
    %v591 = vmul.f32 %v586, %v590
    %v592 = vmul.f32 %v219, %v591
    %vm593 = vcmp.eq.f32.partialorder %v219, inf
    %v594 = vsel %vm593, %v219, %v592
    %vm595 = vcmp.eq.f32.partialorder %v219, 0.0
    %v596 = vand.u32 %v219, 2147483648
    %v597 = vsel %vm595, %v596, %v594
    %v598 = vrsqrt.pop %v222
    %v599 = vmul.f32 %v598, %v222
    %v600 = vmul.f32 %v599, %v598
    %v601 = vmul.f32 0.5, %v600
    %v602 = vsub.f32 1.5, %v601
    %v603 = vmul.f32 %v598, %v602
    %v604 = vmul.f32 %v222, %v603
    %vm605 = vcmp.eq.f32.partialorder %v222, inf
    %v606 = vsel %vm605, %v222, %v604
    %vm607 = vcmp.eq.f32.partialorder %v222, 0.0
    %v608 = vand.u32 %v222, 2147483648
    %v609 = vsel %vm607, %v608, %v606
    %v610 = vrsqrt.pop %v225
    %v611 = vmul.f32 %v610, %v225
    %v612 = vmul.f32 %v611, %v610
    %v613 = vmul.f32 0.5, %v612
    %v614 = vsub.f32 1.5, %v613
    %v615 = vmul.f32 %v610, %v614
    %v616 = vmul.f32 %v225, %v615
    %vm617 = vcmp.eq.f32.partialorder %v225, inf
    %v618 = vsel %vm617, %v225, %v616
    %vm619 = vcmp.eq.f32.partialorder %v225, 0.0
    %v620 = vand.u32 %v225, 2147483648
    %v621 = vsel %vm619, %v620, %v618
    %v622 = vrsqrt.pop %v228
    %v623 = vmul.f32 %v622, %v228
    %v624 = vmul.f32 %v623, %v622
    %v625 = vmul.f32 0.5, %v624
    %v626 = vsub.f32 1.5, %v625
    %v627 = vmul.f32 %v622, %v626
    %v628 = vmul.f32 %v228, %v627
    %vm629 = vcmp.eq.f32.partialorder %v228, inf
    %v630 = vsel %vm629, %v228, %v628
    %vm631 = vcmp.eq.f32.partialorder %v228, 0.0
    %v632 = vand.u32 %v228, 2147483648
    %v633 = vsel %vm631, %v632, %v630
    %v634 = vrsqrt.pop %v231
    %v635 = vmul.f32 %v634, %v231
    %v636 = vmul.f32 %v635, %v634
    %v637 = vmul.f32 0.5, %v636
    %v638 = vsub.f32 1.5, %v637
    %v639 = vmul.f32 %v634, %v638
    %v640 = vmul.f32 %v231, %v639
    %vm641 = vcmp.eq.f32.partialorder %v231, inf
    %v642 = vsel %vm641, %v231, %v640
    %vm643 = vcmp.eq.f32.partialorder %v231, 0.0
    %v644 = vand.u32 %v231, 2147483648
    %v645 = vsel %vm643, %v644, %v642
    %v646 = vrsqrt.pop %v234
    %v647 = vmul.f32 %v646, %v234
    %v648 = vmul.f32 %v647, %v646
    %v649 = vmul.f32 0.5, %v648
    %v650 = vsub.f32 1.5, %v649
    %v651 = vmul.f32 %v646, %v650
    %v652 = vmul.f32 %v234, %v651
    %vm653 = vcmp.eq.f32.partialorder %v234, inf
    %v654 = vsel %vm653, %v234, %v652
    %vm655 = vcmp.eq.f32.partialorder %v234, 0.0
    %v656 = vand.u32 %v234, 2147483648
    %v657 = vsel %vm655, %v656, %v654
    %v658 = vrsqrt.pop %v237
    %v659 = vmul.f32 %v658, %v237
    %v660 = vmul.f32 %v659, %v658
    %v661 = vmul.f32 0.5, %v660
    %v662 = vsub.f32 1.5, %v661
    %v663 = vmul.f32 %v658, %v662
    %v664 = vmul.f32 %v237, %v663
    %vm665 = vcmp.eq.f32.partialorder %v237, inf
    %v666 = vsel %vm665, %v237, %v664
    %vm667 = vcmp.eq.f32.partialorder %v237, 0.0
    %v668 = vand.u32 %v237, 2147483648
    %v669 = vsel %vm667, %v668, %v666
    %v670 = vmul.f32 %v489, -0.5
    %v671 = vmul.f32 %v501, -0.5
    %v672 = vmul.f32 %v513, -0.5
    %v673 = vmul.f32 %v525, -0.5
    %v674 = vmul.f32 %v537, -0.5
    %v675 = vmul.f32 %v549, -0.5
    %v676 = vmul.f32 %v561, -0.5
    %v677 = vmul.f32 %v573, -0.5
    %v678 = vmul.f32 %v585, -0.5
    %v679 = vmul.f32 %v597, -0.5
    %v680 = vmul.f32 %v609, -0.5
    %v681 = vmul.f32 %v621, -0.5
    %v682 = vmul.f32 %v633, -0.5
    %v683 = vmul.f32 %v645, -0.5
    %v684 = vmul.f32 %v657, -0.5
    %v685 = vmul.f32 %v669, -0.5
    %v686 = vmul.f32 %v670, 1.442695
    %v687 = vpow.pop %v686
    %v688 = vmul.f32 %v671, 1.442695
    %v689 = vpow.pop %v688
    %v690 = vmul.f32 %v672, 1.442695
    %v691 = vpow.pop %v690
    %v692 = vmul.f32 %v673, 1.442695
    %v693 = vpow.pop %v692
    %v694 = vmul.f32 %v674, 1.442695
    %v695 = vpow.pop %v694
    %v696 = vmul.f32 %v675, 1.442695
    %v697 = vpow.pop %v696
    %v698 = vmul.f32 %v676, 1.442695
    %v699 = vpow.pop %v698
    %v700 = vmul.f32 %v677, 1.442695
    %v701 = vpow.pop %v700
    %v702 = vmul.f32 %v678, 1.442695
    %v703 = vpow.pop %v702
    %v704 = vmul.f32 %v679, 1.442695
    %v705 = vpow.pop %v704
    %v706 = vmul.f32 %v680, 1.442695
    %v707 = vpow.pop %v706
    %v708 = vmul.f32 %v681, 1.442695
    %v709 = vpow.pop %v708
    %v710 = vmul.f32 %v682, 1.442695
    %v711 = vpow.pop %v710
    %v712 = vmul.f32 %v683, 1.442695
    %v713 = vpow.pop %v712
    %v714 = vmul.f32 %v684, 1.442695
    %v715 = vpow.pop %v714
    %v716 = vmul.f32 %v685, 1.442695
    %v717 = vpow.pop %v716
    %v718 = vsub.f32 1.25, %v447
    %v719 = vsub.f32 1.25, %v449
    %v720 = vsub.f32 1.25, %v451
    %v721 = vsub.f32 1.25, %v453
    %v722 = vsub.f32 1.25, %v455
    %v723 = vsub.f32 1.25, %v457
    %v724 = vsub.f32 1.25, %v459
    %v725 = vsub.f32 1.25, %v461
    %v726 = vsub.f32 1.25, %v463
    %v727 = vsub.f32 1.25, %v465
    %v728 = vsub.f32 1.25, %v467
    %v729 = vsub.f32 1.25, %v469
    %v730 = vsub.f32 1.25, %v471
    %v731 = vsub.f32 1.25, %v473
    %v732 = vsub.f32 1.25, %v475
    %v733 = vsub.f32 1.25, %v477
    %v734 = vmax.f32 %v718, 0.0
    %v735 = vmax.f32 %v719, 0.0
    %v736 = vmax.f32 %v720, 0.0
    %v737 = vmax.f32 %v721, 0.0
    %v738 = vmax.f32 %v722, 0.0
    %v739 = vmax.f32 %v723, 0.0
    %v740 = vmax.f32 %v724, 0.0
    %v741 = vmax.f32 %v725, 0.0
    %v742 = vmax.f32 %v726, 0.0
    %v743 = vmax.f32 %v727, 0.0
    %v744 = vmax.f32 %v728, 0.0
    %v745 = vmax.f32 %v729, 0.0
    %v746 = vmax.f32 %v730, 0.0
    %v747 = vmax.f32 %v731, 0.0
    %v748 = vmax.f32 %v732, 0.0
    %v749 = vmax.f32 %v733, 0.0
    %v750 = vsub.f32 0.0, %v734
    %v751 = vsub.f32 0.0, %v735
    %v752 = vsub.f32 0.0, %v736
    %v753 = vsub.f32 0.0, %v737
    %v754 = vsub.f32 0.0, %v738
    %v755 = vsub.f32 0.0, %v739
    %v756 = vsub.f32 0.0, %v740
    %v757 = vsub.f32 0.0, %v741
    %v758 = vsub.f32 0.0, %v742
    %v759 = vsub.f32 0.0, %v743
    %v760 = vsub.f32 0.0, %v744
    %v761 = vsub.f32 0.0, %v745
    %v762 = vsub.f32 0.0, %v746
    %v763 = vsub.f32 0.0, %v747
    %v764 = vsub.f32 0.0, %v748
    %v765 = vsub.f32 0.0, %v749
    %v766 = vsub.f32 %v447, 0.75
    %v767 = vsub.f32 %v449, 0.75
    %v768 = vsub.f32 %v451, 0.75
    %v769 = vsub.f32 %v453, 0.75
    %v770 = vsub.f32 %v455, 0.75
    %v771 = vsub.f32 %v457, 0.75
    %v772 = vsub.f32 %v459, 0.75
    %v773 = vsub.f32 %v461, 0.75
    %v774 = vsub.f32 %v463, 0.75
    %v775 = vsub.f32 %v465, 0.75
    %v776 = vsub.f32 %v467, 0.75
    %v777 = vsub.f32 %v469, 0.75
    %v778 = vsub.f32 %v471, 0.75
    %v779 = vsub.f32 %v473, 0.75
    %v780 = vsub.f32 %v475, 0.75
    %v781 = vsub.f32 %v477, 0.75
    %v782 = vmul.f32 %v750, %v766
    %v783 = vmul.f32 %v751, %v767
    %v784 = vmul.f32 %v752, %v768
    %v785 = vmul.f32 %v753, %v769
    %v786 = vmul.f32 %v754, %v770
    %v787 = vmul.f32 %v755, %v771
    %v788 = vmul.f32 %v756, %v772
    %v789 = vmul.f32 %v757, %v773
    %v790 = vmul.f32 %v758, %v774
    %v791 = vmul.f32 %v759, %v775
    %v792 = vmul.f32 %v760, %v776
    %v793 = vmul.f32 %v761, %v777
    %v794 = vmul.f32 %v762, %v778
    %v795 = vmul.f32 %v763, %v779
    %v796 = vmul.f32 %v764, %v780
    %v797 = vmul.f32 %v765, %v781
    %v798 = vmul.f32 %v782, 256.0
    %v799 = vmul.f32 %v783, 256.0
    %v800 = vmul.f32 %v784, 256.0
    %v801 = vmul.f32 %v785, 256.0
    %v802 = vmul.f32 %v786, 256.0
    %v803 = vmul.f32 %v787, 256.0
    %v804 = vmul.f32 %v788, 256.0
    %v805 = vmul.f32 %v789, 256.0
    %v806 = vmul.f32 %v790, 256.0
    %v807 = vmul.f32 %v791, 256.0
    %v808 = vmul.f32 %v792, 256.0
    %v809 = vmul.f32 %v793, 256.0
    %v810 = vmul.f32 %v794, 256.0
    %v811 = vmul.f32 %v795, 256.0
    %v812 = vmul.f32 %v796, 256.0
    %v813 = vmul.f32 %v797, 256.0
    %v814 = vadd.f32 %v687, 0.25
    %v815 = vadd.f32 %v689, 0.25
    %v816 = vadd.f32 %v691, 0.25
    %v817 = vadd.f32 %v693, 0.25
    %v818 = vadd.f32 %v695, 0.25
    %v819 = vadd.f32 %v697, 0.25
    %v820 = vadd.f32 %v699, 0.25
    %v821 = vadd.f32 %v701, 0.25
    %v822 = vadd.f32 %v703, 0.25
    %v823 = vadd.f32 %v705, 0.25
    %v824 = vadd.f32 %v707, 0.25
    %v825 = vadd.f32 %v709, 0.25
    %v826 = vadd.f32 %v711, 0.25
    %v827 = vadd.f32 %v713, 0.25
    %v828 = vadd.f32 %v715, 0.25
    %v829 = vadd.f32 %v717, 0.25
    %v830 = vmax.f32 %v814, 0.0
    %v831 = vmax.f32 %v815, 0.0
    %v832 = vmax.f32 %v816, 0.0
    %v833 = vmax.f32 %v817, 0.0
    %v834 = vmax.f32 %v818, 0.0
    %v835 = vmax.f32 %v819, 0.0
    %v836 = vmax.f32 %v820, 0.0
    %v837 = vmax.f32 %v821, 0.0
    %v838 = vmax.f32 %v822, 0.0
    %v839 = vmax.f32 %v823, 0.0
    %v840 = vmax.f32 %v824, 0.0
    %v841 = vmax.f32 %v825, 0.0
    %v842 = vmax.f32 %v826, 0.0
    %v843 = vmax.f32 %v827, 0.0
    %v844 = vmax.f32 %v828, 0.0
    %v845 = vmax.f32 %v829, 0.0
    %v846 = vsub.f32 %v687, 0.25
    %v847 = vsub.f32 %v689, 0.25
    %v848 = vsub.f32 %v691, 0.25
    %v849 = vsub.f32 %v693, 0.25
    %v850 = vsub.f32 %v695, 0.25
    %v851 = vsub.f32 %v697, 0.25
    %v852 = vsub.f32 %v699, 0.25
    %v853 = vsub.f32 %v701, 0.25
    %v854 = vsub.f32 %v703, 0.25
    %v855 = vsub.f32 %v705, 0.25
    %v856 = vsub.f32 %v707, 0.25
    %v857 = vsub.f32 %v709, 0.25
    %v858 = vsub.f32 %v711, 0.25
    %v859 = vsub.f32 %v713, 0.25
    %v860 = vsub.f32 %v715, 0.25
    %v861 = vsub.f32 %v717, 0.25
    %v862 = vmul.f32 %v830, %v846
    %v863 = vmul.f32 %v831, %v847
    %v864 = vmul.f32 %v832, %v848
    %v865 = vmul.f32 %v833, %v849
    %v866 = vmul.f32 %v834, %v850
    %v867 = vmul.f32 %v835, %v851
    %v868 = vmul.f32 %v836, %v852
    %v869 = vmul.f32 %v837, %v853
    %v870 = vmul.f32 %v838, %v854
    %v871 = vmul.f32 %v839, %v855
    %v872 = vmul.f32 %v840, %v856
    %v873 = vmul.f32 %v841, %v857
    %v874 = vmul.f32 %v842, %v858
    %v875 = vmul.f32 %v843, %v859
    %v876 = vmul.f32 %v844, %v860
    %v877 = vmul.f32 %v845, %v861
    %v878 = vmul.f32 %v862, 256.0
    %v879 = vmul.f32 %v863, 256.0
    %v880 = vmul.f32 %v864, 256.0
    %v881 = vmul.f32 %v865, 256.0
    %v882 = vmul.f32 %v866, 256.0
    %v883 = vmul.f32 %v867, 256.0
    %v884 = vmul.f32 %v868, 256.0
    %v885 = vmul.f32 %v869, 256.0
    %v886 = vmul.f32 %v870, 256.0
    %v887 = vmul.f32 %v871, 256.0
    %v888 = vmul.f32 %v872, 256.0
    %v889 = vmul.f32 %v873, 256.0
    %v890 = vmul.f32 %v874, 256.0
    %v891 = vmul.f32 %v875, 256.0
    %v892 = vmul.f32 %v876, 256.0
    %v893 = vmul.f32 %v877, 256.0
    %s894 = smul.u32 0, 128
    %v895 = vlaneseq
    %v896 = vshrl.u32 %v895, 7
    %v897 = vmul.u32 %v896, 128
    %v898 = vstv %s894
    %v899 = vadd.s32 %v898, %v897
    %v900 = vlaneseq
    %v901 = vand.u32 %v900, 127
    %v902 = vadd.s32 %v899, %v901
    %vm903 = vcmp.lt.s32.totalorder %v902, 8
    %v920 = vperm.slane %v798, %v901
    %v921 = vadd.s32 %v901, 4294967288
    %v922 = vperm.slane %v799, %v921
    %vm923 = vcmask 130112
    %v924 = vsel %vm923, %v922, %v920
    %v925 = vadd.s32 %v901, 4294967280
    %v926 = vperm.slane %v800, %v925
    %vm927 = vcmask 195712
    %v928 = vsel %vm927, %v926, %v924
    %v929 = vadd.s32 %v901, 4294967272
    %v930 = vperm.slane %v801, %v929
    %vm931 = vcmask 261312
    %v932 = vsel %vm931, %v930, %v928
    %v933 = vadd.s32 %v901, 4294967264
    %v934 = vperm.slane %v802, %v933
    %vm935 = vcmask 326912
    %v936 = vsel %vm935, %v934, %v932
    %v937 = vadd.s32 %v901, 4294967256
    %v938 = vperm.slane %v803, %v937
    %vm939 = vcmask 392512
    %v940 = vsel %vm939, %v938, %v936
    %v941 = vadd.s32 %v901, 4294967248
    %v942 = vperm.slane %v804, %v941
    %vm943 = vcmask 458112
    %v944 = vsel %vm943, %v942, %v940
    %v945 = vadd.s32 %v901, 4294967240
    %v946 = vperm.slane %v805, %v945
    %vm947 = vcmask 523712
    %v948 = vsel %vm947, %v946, %v944
    %v949 = vadd.s32 %v901, 4294967232
    %v950 = vperm.slane %v806, %v949
    %vm951 = vcmask 589312
    %v952 = vsel %vm951, %v950, %v948
    %v953 = vadd.s32 %v901, 4294967224
    %v954 = vperm.slane %v807, %v953
    %vm955 = vcmask 654912
    %v956 = vsel %vm955, %v954, %v952
    %v957 = vadd.s32 %v901, 4294967216
    %v958 = vperm.slane %v808, %v957
    %vm959 = vcmask 720512
    %v960 = vsel %vm959, %v958, %v956
    %v961 = vadd.s32 %v901, 4294967208
    %v962 = vperm.slane %v809, %v961
    %vm963 = vcmask 786112
    %v964 = vsel %vm963, %v962, %v960
    %v965 = vadd.s32 %v901, 4294967200
    %v966 = vperm.slane %v810, %v965
    %vm967 = vcmask 851712
    %v968 = vsel %vm967, %v966, %v964
    %v969 = vadd.s32 %v901, 4294967192
    %v970 = vperm.slane %v811, %v969
    %vm971 = vcmask 917312
    %v972 = vsel %vm971, %v970, %v968
    %v973 = vadd.s32 %v901, 4294967184
    %v974 = vperm.slane %v812, %v973
    %vm975 = vcmask 982912
    %v976 = vsel %vm975, %v974, %v972
    %v977 = vadd.s32 %v901, 4294967176
    %v978 = vperm.slane %v813, %v977
    %vm979 = vcmask 1048512
    %v980 = vsel %vm979, %v978, %v976
    %v982 = vsel %vm903, %v980, -1e+30
    %v999 = vperm.slane %v878, %v901
    %v1000 = vperm.slane %v879, %v921
    %v1001 = vsel %vm923, %v1000, %v999
    %v1002 = vperm.slane %v880, %v925
    %v1003 = vsel %vm927, %v1002, %v1001
    %v1004 = vperm.slane %v881, %v929
    %v1005 = vsel %vm931, %v1004, %v1003
    %v1006 = vperm.slane %v882, %v933
    %v1007 = vsel %vm935, %v1006, %v1005
    %v1008 = vperm.slane %v883, %v937
    %v1009 = vsel %vm939, %v1008, %v1007
    %v1010 = vperm.slane %v884, %v941
    %v1011 = vsel %vm943, %v1010, %v1009
    %v1012 = vperm.slane %v885, %v945
    %v1013 = vsel %vm947, %v1012, %v1011
    %v1014 = vperm.slane %v886, %v949
    %v1015 = vsel %vm951, %v1014, %v1013
    %v1016 = vperm.slane %v887, %v953
    %v1017 = vsel %vm955, %v1016, %v1015
    %v1018 = vperm.slane %v888, %v957
    %v1019 = vsel %vm959, %v1018, %v1017
    %v1020 = vperm.slane %v889, %v961
    %v1021 = vsel %vm963, %v1020, %v1019
    %v1022 = vperm.slane %v890, %v965
    %v1023 = vsel %vm967, %v1022, %v1021
    %v1024 = vperm.slane %v891, %v969
    %v1025 = vsel %vm971, %v1024, %v1023
    %v1026 = vperm.slane %v892, %v973
    %v1027 = vsel %vm975, %v1026, %v1025
    %v1028 = vperm.slane %v893, %v977
    %v1029 = vsel %vm979, %v1028, %v1027
    %v1031 = vsel %vm903, %v1029, -1e+30
    %v1032 = vsub.f32 %v982, %v982
    %v1033 = vmul.f32 %v1032, 1.442695
    %v1034 = vpow.pop %v1033
    %v1035 = vadd.f32 %v1034, 0.0
    %v1036 = vld [vmem:[#allocation2] sm:$0x1]
    %v1037 = vmax.f32 %v1036, %v982
    %v1038 = vld [vmem:[#allocation6] sm:$0x1]
    %v1039 = vsub.f32 %v1036, %v1037
    %v1040 = vmul.f32 %v1039, 1.442695
    %v1041 = vpow.pop %v1040
    %v1042 = vmul.f32 %v1038, %v1041
    %v1043 = vsub.f32 %v982, %v1037
    %v1044 = vmul.f32 %v1043, 1.442695
    %v1045 = vpow.pop %v1044
    %v1046 = vmul.f32 %v1035, %v1045
    %v1047 = vadd.f32 %v1042, %v1046
    %1048 = vst [vmem:[#allocation6] sm:$0x1] %v1047
    %1049 = vst [vmem:[#allocation2] sm:$0x1] %v1037
    %v1050 = vsub.f32 %v1031, %v1031
    %v1051 = vmul.f32 %v1050, 1.442695
    %v1052 = vpow.pop %v1051
    %v1053 = vadd.f32 %v1052, 0.0
    %v1054 = vld [vmem:[#allocation4] sm:$0x1]
    %v1055 = vmax.f32 %v1054, %v1031
    %v1056 = vld [vmem:[#allocation7] sm:$0x1]
    %v1057 = vsub.f32 %v1054, %v1055
    %v1058 = vmul.f32 %v1057, 1.442695
    %v1059 = vpow.pop %v1058
    %v1060 = vmul.f32 %v1056, %v1059
    %v1061 = vsub.f32 %v1031, %v1055
    %v1062 = vmul.f32 %v1061, 1.442695
    %v1063 = vpow.pop %v1062
    %v1064 = vmul.f32 %v1053, %v1063
    %v1065 = vadd.f32 %v1060, %v1064
    %1066 = vst [vmem:[#allocation7] sm:$0x1] %v1065
    %1067 = vst [vmem:[#allocation4] sm:$0x1] %v1055
    // Predicated region
    $region18: #{tpu_custom_call.1} parent=1 // pred_check
      _
    $region19: #{tpu_custom_call.1} parent=1 // pred_check_branch
      %1069 = sbr.rel (0) target = $region21
    $region20: #{tpu_custom_call.1} parent=1 // pred_region
      %1071 = vsyncadd [#allocation3], 0
      %s1073 = sshll.u32 [#allocation2], 4
      %s1074 = int_to_ptr.vmem [resolvable:$true] %s1073
      %s1075 = sshll.u32 %s3, 4
      %s1076 = int_to_ptr.hbm [resolvable:$true] %s1075
      %1078 = dma.vmem_to_hbm [thread:$0]  %s1074, 16, %s1076, [#allocation3]
    $region21: #{tpu_custom_call.1} parent=1 // pred_fallthru
      _
    // Predicated region
    $region22: #{tpu_custom_call.1} parent=1 // pred_check
      _
    $region23: #{tpu_custom_call.1} parent=1 // pred_check_branch
      %1080 = sbr.rel (0) target = $region25
    $region24: #{tpu_custom_call.1} parent=1 // pred_region
      %1082 = vsyncadd [#allocation5], 0
      %s1084 = sshll.u32 [#allocation4], 4
      %s1085 = int_to_ptr.vmem [resolvable:$true] %s1084
      %s1086 = sshll.u32 %s4, 4
      %s1087 = int_to_ptr.hbm [resolvable:$true] %s1086
      %1089 = dma.vmem_to_hbm [thread:$0]  %s1085, 16, %s1087, [#allocation5]
    $region25: #{tpu_custom_call.1} parent=1 // pred_fallthru
      _
    // Predicated region
    $region26: #{tpu_custom_call.1} parent=1 // pred_check
      _
    $region27: #{tpu_custom_call.1} parent=1 // pred_check_branch
      %1091 = sbr.rel (0) target = $region29
    $region28: #{tpu_custom_call.1} parent=1 // pred_region
      %1093 = vsyncadd [#allocation5], 0
      %s1095 = sshll.u32 [#allocation6], 4
      %s1096 = int_to_ptr.vmem [resolvable:$true] %s1095
      %s1097 = sshll.u32 %s5, 4
      %s1098 = int_to_ptr.hbm [resolvable:$true] %s1097
      %1100 = dma.vmem_to_hbm [thread:$0]  %s1096, 16, %s1098, [#allocation5]
    $region29: #{tpu_custom_call.1} parent=1 // pred_fallthru
      _
    // Predicated region
    $region30: #{tpu_custom_call.1} parent=1 // pred_check
      _
    $region31: #{tpu_custom_call.1} parent=1 // pred_check_branch
      %1102 = sbr.rel (0) target = $region33
    $region32: #{tpu_custom_call.1} parent=1 // pred_region
      %1104 = vsyncadd [#allocation8], 0
      %s1106 = sshll.u32 [#allocation7], 4
      %s1107 = int_to_ptr.vmem [resolvable:$true] %s1106
      %s1108 = sshll.u32 %s6, 4
      %s1109 = int_to_ptr.hbm [resolvable:$true] %s1108
      %1111 = dma.vmem_to_hbm [thread:$0]  %s1107, 16, %s1109, [#allocation8]
    $region33: #{tpu_custom_call.1} parent=1 // pred_fallthru
      _
    // Predicated region
    $region34: #{tpu_custom_call.1} parent=1 // pred_check
      _
    $region35: #{tpu_custom_call.1} parent=1 // pred_check_branch
      %1113 = sbr.rel (0) target = $region37
    $region36: #{tpu_custom_call.1} parent=1 // pred_region
      %1115 = dma.done [#allocation3], 16
    $region37: #{tpu_custom_call.1} parent=1 // pred_fallthru
      _
    // Predicated region
    $region38: #{tpu_custom_call.1} parent=1 // pred_check
      _
    $region39: #{tpu_custom_call.1} parent=1 // pred_check_branch
      %1117 = sbr.rel (0) target = $region41
    $region40: #{tpu_custom_call.1} parent=1 // pred_region
      %1119 = dma.done [#allocation5], 16
    $region41: #{tpu_custom_call.1} parent=1 // pred_fallthru
      _
    // Predicated region
    $region42: #{tpu_custom_call.1} parent=1 // pred_check
      _
    $region43: #{tpu_custom_call.1} parent=1 // pred_check_branch
      %1121 = sbr.rel (0) target = $region45
    $region44: #{tpu_custom_call.1} parent=1 // pred_region
      %1123 = dma.done [#allocation5], 16
    $region45: #{tpu_custom_call.1} parent=1 // pred_fallthru
      _
    // Predicated region
    $region46: #{tpu_custom_call.1} parent=1 // pred_check
      _
    $region47: #{tpu_custom_call.1} parent=1 // pred_check_branch
      %1125 = sbr.rel (0) target = $region49
    $region48: #{tpu_custom_call.1} parent=1 // pred_region
      %1127 = dma.done [#allocation8], 16
    $region49: #{tpu_custom_call.1} parent=1 // pred_fallthru
      _
    %1128 = vsyncpa [#allocation3], 1
    %1129 = vsyncpa [#allocation5], 1
    %1130 = vsyncpa [#allocation8], 1

</llo_original>
